<compile_context>
chip_gen: v7x
topology: tpu7x:2x2x1
jax: 0.10.0
libtpu: 0.0.40
codegen_flags: <defaults>
</compile_context>

<pallas_src>
import jax
import jax.numpy as jnp
from jax.experimental import pallas as pl
from jax.experimental.pallas import tpu as pltpu

_LANE = 128


def _make_robust_loss_kernel(*, alpha, c, eps, log, tile_rows):
    alpha = float(alpha)
    c = float(c)
    a2 = abs(alpha - 2.0)
    assert alpha != 0.0 and a2 != 0.0, "alpha in {0, 2} unsupported by formula"
    prefac = a2 / alpha            # |a-2| / a        (compile-time constant)
    scale = 1.0 / (c * c * a2)     # folds /c^2 and /|a-2| into one multiply
    half_alpha = alpha / 2.0
    n_sub = tile_rows // 8         # (8,128) vreg groups per block

    def kernel(pred_ref, gt_ref, sum_out_ref, cnt_out_ref, acc_sum, acc_cnt):
        i = pl.program_id(1)       # tile within split (sequential reduction)

        @pl.when(i == 0)
        def _init():
            acc_sum[...] = jnp.zeros_like(acc_sum)   # single vreg each
            acc_cnt[...] = jnp.zeros_like(acc_cnt)

        gt_raw = gt_ref[...].astype(jnp.float32)
        pred = pred_ref[...].astype(jnp.float32)

        valid = gt_raw > 0.0                 # mask uses raw gt (pre-log)
        m = valid.astype(jnp.float32)

        if log:
            gt_v = jnp.log(gt_raw + eps)
            pred_v = jnp.log(pred + eps)
        else:
            gt_v = gt_raw
            pred_v = pred

        # One select: masked / padded lanes get err = 0 -> x = 1 -> rl = 0,
        # so rl can be accumulated without a second select.
        err = jnp.where(valid, gt_v - pred_v, 0.0)
        x = err * err
        if scale != 1.0:
            x = x * scale
        x = x + 1.0
        if half_alpha == 0.5:                 # default alpha=1: plain sqrt
            p = jnp.sqrt(x)
        elif half_alpha == 1.0:               # alpha=2 excluded above; unreachable
            p = x
        elif half_alpha == 1.5:
            p = x * jnp.sqrt(x)
        elif float(half_alpha).is_integer() and 0.0 < half_alpha <= 8.0:
            p = x ** int(half_alpha)          # integer power -> multiplies
        else:
            p = jnp.power(x, half_alpha)
        rl = p - 1.0
        if prefac != 1.0:
            rl = prefac * rl

        # Fold the whole block into one vreg-sized accumulator: reshape along
        # sublane-tile boundaries (free) and sum the leading axis (VPU adds).
        acc_sum[...] += jnp.sum(rl.reshape(n_sub, 8, _LANE), axis=0)
        acc_cnt[...] += jnp.sum(m.reshape(n_sub, 8, _LANE), axis=0)

        @pl.when(i == pl.num_programs(1) - 1)
        def _finalize():
            s_total = jnp.sum(acc_sum[...])   # cross-lane reduce of 1 vreg
            c_total = jnp.sum(acc_cnt[...])
            sum_out_ref[...] = jnp.zeros(sum_out_ref.shape, jnp.float32) + s_total
            cnt_out_ref[...] = jnp.zeros(cnt_out_ref.shape, jnp.float32) + c_total

    return kernel


def robust_loss(pred_depth, gt_depth, *, loss_weight=1.0, alpha=1, c=2,
                log=False, eps=1e-3, tile_rows=4096, num_splits=1,
                core_parallel=False):
    """Pallas implementation of RobustLoss.forward (non-adaptive).

    tile_rows: rows (x128 lanes) per streaming block.  4096 (8 MiB of
      double-buffered f32 inputs) fits every generation's default scoped VMEM;
      v6e/v7x can go to 8192 (vmem_limit is raised automatically).
    num_splits / core_parallel: on v7x use num_splits=2, core_parallel=True to
      shard the split axis across both TensorCores.  Default 1 (v5e/v6e have a
      single TC, a second split is pure overhead there).
    """
    assert pred_depth.shape == gt_depth.shape
    n = pred_depth.size

    itemsize = jnp.dtype(pred_depth.dtype).itemsize
    # Sub-32-bit dtypes pack rows along sublanes -> keep row blocks aligned.
    row_align = 8 if itemsize >= 4 else (16 if itemsize == 2 else 32)

    rows = pl.cdiv(n, _LANE)
    rows_aligned = pl.cdiv(rows, row_align) * row_align

    tile_rows = max(row_align, (int(tile_rows) // row_align) * row_align)
    tile_rows = int(min(tile_rows, rows_aligned))

    total_tiles = pl.cdiv(rows, tile_rows)
    num_splits = int(max(1, min(int(num_splits), total_tiles)))
    tiles_per_split = pl.cdiv(total_tiles, num_splits)   # exact after padding
    rows_padded = tiles_per_split * num_splits * tile_rows

    # Keep native dtype on the HBM side; cast to f32 inside the kernel.
    pred_f = pred_depth.reshape(-1)
    gt_f = gt_depth.reshape(-1)
    total_elems = rows_padded * _LANE
    if total_elems != n:
        # Padded gt == 0 is excluded by the in-kernel gt>0 mask.  This is a
        # full-array copy; it only triggers for sizes that are not already
        # lane/tile aligned (typical depth maps with H*W % 128 == 0 skip it).
        pad = total_elems - n
        pred_f = jnp.pad(pred_f, (0, pad))
        gt_f = jnp.pad(gt_f, (0, pad))
    pred2 = pred_f.reshape(rows_padded, _LANE)
    gt2 = gt_f.reshape(rows_padded, _LANE)

    def in_map(s, i):
        return (s * tiles_per_split + i, 0)   # exact, no clamp needed

    kernel = _make_robust_loss_kernel(
        alpha=alpha, c=c, eps=float(eps), log=bool(log), tile_rows=tile_rows)

    # 2 inputs x 2 pipeline buffers; scratch is now only 2 x (8,128) f32.
    io_bytes = 2 * 2 * tile_rows * _LANE * itemsize
    vmem_limit = None
    if io_bytes + (1 << 20) > (12 << 20):
        vmem_limit = int(min(io_bytes + (4 << 20), 40 << 20))

    if core_parallel and num_splits > 1:
        split_sem = pltpu.CORE_PARALLEL     # shard splits across TCs (v7x)
    else:
        split_sem = "parallel"

    sums, cnts = pl.pallas_call(
        kernel,
        out_shape=(jax.ShapeDtypeStruct((num_splits, 8, _LANE), jnp.float32),
                   jax.ShapeDtypeStruct((num_splits, 8, _LANE), jnp.float32)),
        grid_spec=pltpu.PrefetchScalarGridSpec(
            num_scalar_prefetch=0,
            grid=(num_splits, tiles_per_split),
            in_specs=[
                pl.BlockSpec((tile_rows, _LANE), in_map),
                pl.BlockSpec((tile_rows, _LANE), in_map),
            ],
            out_specs=[
                pl.BlockSpec((1, 8, _LANE), lambda s, i: (s, 0, 0)),
                pl.BlockSpec((1, 8, _LANE), lambda s, i: (s, 0, 0)),
            ],
            scratch_shapes=[
                pltpu.VMEM((8, _LANE), jnp.float32),  # masked-sum accumulator
                pltpu.VMEM((8, _LANE), jnp.float32),  # masked-count accumulator
            ]),
        compiler_params=pltpu.CompilerParams(
            dimension_semantics=(split_sem, "arbitrary"),
            vmem_limit_bytes=vmem_limit),
    )(pred2, gt2)

    total_sum = jnp.sum(sums[:, 0, 0])
    total_cnt = jnp.sum(cnts[:, 0, 0])
    # total_cnt == 0 (no valid gt) yields NaN, matching the reference
    # (mean over an empty masked selection).
    return (float(loss_weight) * total_sum / total_cnt).astype(jnp.float32)


def robust_loss_reference(pred_depth, gt_depth, *, loss_weight=1.0, alpha=1,
                          c=2, log=False, eps=1e-3):
    """Pure-JAX reference matching the PyTorch forward."""
    pred = pred_depth.astype(jnp.float32)
    gt = gt_depth.astype(jnp.float32)
    mask = gt > 0
    if log:
        gt = jnp.log(gt + eps)
        pred = jnp.log(pred + eps)
    err = jnp.where(mask, gt - pred, 0.0)
    a2 = abs(alpha - 2.0)
    rl = (a2 / alpha) * (jnp.power((err / c) ** 2 / a2 + 1.0, alpha / 2.0) - 1.0)
    rl = jnp.where(mask, rl, 0.0)
    return loss_weight * jnp.sum(rl) / jnp.sum(mask.astype(jnp.float32))


if __name__ == "__main__":
    # layout: NCHW depth maps, batch=2, channels=4, spatial=16x16
    B, C, H, W = 2, 4, 16, 16
    key = jax.random.PRNGKey(0)
    k_pred, k_gt, k_mask, k_pred2, k_gt2 = jax.random.split(key, 5)

    pred = jax.random.uniform(k_pred, (B, C, H, W), jnp.float32, 0.5, 10.0)
    gt_vals = jax.random.uniform(k_gt, (B, C, H, W), jnp.float32, 0.5, 10.0)
    # ~25% invalid (zero) depth pixels to exercise the mask
    invalid = jax.random.uniform(k_mask, (B, C, H, W)) < 0.25
    gt = jnp.where(invalid, 0.0, gt_vals)

    # 1) default config (single tile here since the input is tiny)
    loss = jax.block_until_ready(robust_loss(pred, gt))
    ref = robust_loss_reference(pred, gt)
    assert jnp.allclose(loss, ref, rtol=1e-5, atol=1e-6), (loss, ref)

    # 2) force multi-tile accumulation within one split
    loss2 = jax.block_until_ready(robust_loss(pred, gt, tile_rows=8, num_splits=1))
    assert jnp.allclose(loss2, ref, rtol=1e-5, atol=1e-6), (loss2, ref)

    # 3) exercise the 2-way split and the log=True path
    loss3 = jax.block_until_ready(
        robust_loss(pred, gt, log=True, tile_rows=8, num_splits=2))
    ref3 = robust_loss_reference(pred, gt, log=True)
    assert jnp.allclose(loss3, ref3, rtol=1e-5, atol=1e-6), (loss3, ref3)

    # 4) ragged size (not a multiple of 128) -> exercises the padded tail path
    shape4 = (3, 5, 7, 11)
    pred4 = jax.random.uniform(k_pred2, shape4, jnp.float32, 0.5, 10.0)
    gt4_vals = jax.random.uniform(k_gt2, shape4, jnp.float32, 0.5, 10.0)
    gt4 = jnp.where(jax.random.uniform(k_mask, shape4) < 0.25, 0.0, gt4_vals)
    loss4 = jax.block_until_ready(robust_loss(pred4, gt4, loss_weight=0.5))
    ref4 = robust_loss_reference(pred4, gt4, loss_weight=0.5)
    assert jnp.allclose(loss4, ref4, rtol=1e-5, atol=1e-6), (loss4, ref4)

    print("KERNEL_OK")
</pallas_src>

<mosaic_0001>
module attributes {stable_mosaic.version = 11 : i64} {
  func.func @kernel(%arg0: i32, %arg1: i32, %arg2: memref<16x128xf32, #tpu.memory_space<vmem>>, %arg3: memref<16x128xf32, #tpu.memory_space<vmem>>, %arg4: memref<1x8x128xf32, #tpu.memory_space<vmem>>, %arg5: memref<1x8x128xf32, #tpu.memory_space<vmem>>, %arg6: memref<8x128xf32, #tpu.memory_space<vmem>>, %arg7: memref<8x128xf32, #tpu.memory_space<vmem>>) attributes {dimension_semantics = [#tpu.dimension_semantics<parallel>, #tpu.dimension_semantics<arbitrary>], iteration_bounds = array<i64: 1, 1>, scalar_prefetch = 0 : i64, scratch_operands = 2 : i64, tpu.core_type = #tpu.core_type<tc>, window_params = [{transform_indices = @transform_0, window_bounds = array<i64: 16, 128>}, {transform_indices = @transform_1, window_bounds = array<i64: 16, 128>}, {transform_indices = @transform_2, window_bounds = array<i64: 1, 8, 128>}, {transform_indices = @transform_3, window_bounds = array<i64: 1, 8, 128>}]} {
    %c0_i32 = arith.constant 0 : i32
    %0 = arith.cmpi eq, %arg1, %c0_i32 : i32
    %1 = arith.extui %0 : i1 to i32
    %c0_i32_0 = arith.constant 0 : i32
    %2 = arith.cmpi ne, %1, %c0_i32_0 : i32
    scf.if %2 {
      %cst_20 = arith.constant 0.000000e+00 : f32
      %33 = vector.broadcast %cst_20 : f32 to vector<8x128xf32>
      %c0_21 = arith.constant 0 : index
      %c0_22 = arith.constant 0 : index
      %34 = vector.load %arg6[%c0_21, %c0_22] : memref<8x128xf32, #tpu.memory_space<vmem>>, vector<8x128xf32>
      tpu.vector_store %arg6[%c0_21, %c0_22], %33 {strides = array<i32>} : memref<8x128xf32, #tpu.memory_space<vmem>>, vector<8x128xf32>,
      %cst_23 = arith.constant 0.000000e+00 : f32
      %35 = vector.broadcast %cst_23 : f32 to vector<8x128xf32>
      %c0_24 = arith.constant 0 : index
      %c0_25 = arith.constant 0 : index
      %36 = vector.load %arg7[%c0_24, %c0_25] : memref<8x128xf32, #tpu.memory_space<vmem>>, vector<8x128xf32>
      tpu.vector_store %arg7[%c0_24, %c0_25], %35 {strides = array<i32>} : memref<8x128xf32, #tpu.memory_space<vmem>>, vector<8x128xf32>,
    } else {
    }
    %c0 = arith.constant 0 : index
    %c0_1 = arith.constant 0 : index
    %3 = vector.load %arg3[%c0, %c0_1] : memref<16x128xf32, #tpu.memory_space<vmem>>, vector<16x128xf32>
    %c0_2 = arith.constant 0 : index
    %c0_3 = arith.constant 0 : index
    %4 = vector.load %arg2[%c0_2, %c0_3] : memref<16x128xf32, #tpu.memory_space<vmem>>, vector<16x128xf32>
    %cst = arith.constant 0.000000e+00 : f32
    %5 = vector.broadcast %cst : f32 to vector<16x128xf32>
    %6 = arith.cmpf ogt, %3, %5 : vector<16x128xf32>
    %7 = arith.extui %6 : vector<16x128xi1> to vector<16x128xi32>
    %8 = arith.sitofp %7 : vector<16x128xi32> to vector<16x128xf32>
    %9 = arith.subf %3, %4 : vector<16x128xf32>
    %cst_4 = arith.constant 0.000000e+00 : f32
    %10 = vector.broadcast %cst_4 : f32 to vector<16x128xf32>
    %11 = arith.select %6, %9, %10 : vector<16x128xi1>, vector<16x128xf32>
    %12 = arith.mulf %11, %11 : vector<16x128xf32>
    %cst_5 = arith.constant 2.500000e-01 : f32
    %13 = vector.broadcast %cst_5 : f32 to vector<16x128xf32>
    %14 = arith.mulf %12, %13 : vector<16x128xf32>
    %cst_6 = arith.constant 1.000000e+00 : f32
    %15 = vector.broadcast %cst_6 : f32 to vector<16x128xf32>
    %16 = arith.addf %14, %15 : vector<16x128xf32>
    %17 = math.sqrt %16 : vector<16x128xf32>
    %cst_7 = arith.constant 1.000000e+00 : f32
    %18 = vector.broadcast %cst_7 : f32 to vector<16x128xf32>
    %19 = arith.subf %17, %18 : vector<16x128xf32>
    %c0_8 = arith.constant 0 : index
    %c0_9 = arith.constant 0 : index
    %20 = vector.load %arg6[%c0_8, %c0_9] : memref<8x128xf32, #tpu.memory_space<vmem>>, vector<8x128xf32>
    %21 = vector.shape_cast %19 : vector<16x128xf32> to vector<2x8x128xf32>
    %cst_10 = arith.constant dense<0.000000e+00> : vector<8x128xf32>
    %22 = vector.multi_reduction <add>, %21, %cst_10 [0] : vector<2x8x128xf32> to vector<8x128xf32>
    %23 = arith.addf %20, %22 : vector<8x128xf32>
    %c0_11 = arith.constant 0 : index
    %c0_12 = arith.constant 0 : index
    %24 = vector.load %arg6[%c0_11, %c0_12] : memref<8x128xf32, #tpu.memory_space<vmem>>, vector<8x128xf32>
    tpu.vector_store %arg6[%c0_11, %c0_12], %23 {strides = array<i32>} : memref<8x128xf32, #tpu.memory_space<vmem>>, vector<8x128xf32>,
    %c0_13 = arith.constant 0 : index
    %c0_14 = arith.constant 0 : index
    %25 = vector.load %arg7[%c0_13, %c0_14] : memref<8x128xf32, #tpu.memory_space<vmem>>, vector<8x128xf32>
    %26 = vector.shape_cast %8 : vector<16x128xf32> to vector<2x8x128xf32>
    %cst_15 = arith.constant dense<0.000000e+00> : vector<8x128xf32>
    %27 = vector.multi_reduction <add>, %26, %cst_15 [0] : vector<2x8x128xf32> to vector<8x128xf32>
    %28 = arith.addf %25, %27 : vector<8x128xf32>
    %c0_16 = arith.constant 0 : index
    %c0_17 = arith.constant 0 : index
    %29 = vector.load %arg7[%c0_16, %c0_17] : memref<8x128xf32, #tpu.memory_space<vmem>>, vector<8x128xf32>
    tpu.vector_store %arg7[%c0_16, %c0_17], %28 {strides = array<i32>} : memref<8x128xf32, #tpu.memory_space<vmem>>, vector<8x128xf32>,
    %c0_i32_18 = arith.constant 0 : i32
    %30 = arith.cmpi eq, %arg1, %c0_i32_18 : i32
    %31 = arith.extui %30 : i1 to i32
    %c0_i32_19 = arith.constant 0 : i32
    %32 = arith.cmpi ne, %31, %c0_i32_19 : i32
    scf.if %32 {
      %c0_20 = arith.constant 0 : index
      %c0_21 = arith.constant 0 : index
      %33 = vector.load %arg6[%c0_20, %c0_21] : memref<8x128xf32, #tpu.memory_space<vmem>>, vector<8x128xf32>
      %34 = vector.shape_cast %33 : vector<8x128xf32> to vector<1x8x128xf32>
      %cst_22 = arith.constant dense<0.000000e+00> : vector<1xf32>
      %35 = vector.multi_reduction <add>, %34, %cst_22 [1, 2] : vector<1x8x128xf32> to vector<1xf32>
      %36 = vector.shape_cast %35 : vector<1xf32> to vector<1x1x1xf32>
      %37 = vector.extract %36[0, 0, 0] : f32 from vector<1x1x1xf32>
      %c0_23 = arith.constant 0 : index
      %c0_24 = arith.constant 0 : index
      %38 = vector.load %arg7[%c0_23, %c0_24] : memref<8x128xf32, #tpu.memory_space<vmem>>, vector<8x128xf32>
      %39 = vector.shape_cast %38 : vector<8x128xf32> to vector<1x8x128xf32>
      %cst_25 = arith.constant dense<0.000000e+00> : vector<1xf32>
      %40 = vector.multi_reduction <add>, %39, %cst_25 [1, 2] : vector<1x8x128xf32> to vector<1xf32>
      %41 = vector.shape_cast %40 : vector<1xf32> to vector<1x1x1xf32>
      %42 = vector.extract %41[0, 0, 0] : f32 from vector<1x1x1xf32>
      %cst_26 = arith.constant 0.000000e+00 : f32
      %43 = vector.broadcast %cst_26 : f32 to vector<1x8x128xf32>
      %44 = vector.broadcast %37 : f32 to vector<1x8x128xf32>
      %45 = arith.addf %43, %44 : vector<1x8x128xf32>
      %c0_27 = arith.constant 0 : index
      %c0_28 = arith.constant 0 : index
      %c0_29 = arith.constant 0 : index
      %46 = vector.load %arg4[%c0_27, %c0_28, %c0_29] : memref<1x8x128xf32, #tpu.memory_space<vmem>>, vector<1x8x128xf32>
      tpu.vector_store %arg4[%c0_27, %c0_28, %c0_29], %45 {strides = array<i32>} : memref<1x8x128xf32, #tpu.memory_space<vmem>>, vector<1x8x128xf32>,
      %cst_30 = arith.constant 0.000000e+00 : f32
      %47 = vector.broadcast %cst_30 : f32 to vector<1x8x128xf32>
      %48 = vector.broadcast %42 : f32 to vector<1x8x128xf32>
      %49 = arith.addf %47, %48 : vector<1x8x128xf32>
      %c0_31 = arith.constant 0 : index
      %c0_32 = arith.constant 0 : index
      %c0_33 = arith.constant 0 : index
      %50 = vector.load %arg5[%c0_31, %c0_32, %c0_33] : memref<1x8x128xf32, #tpu.memory_space<vmem>>, vector<1x8x128xf32>
      tpu.vector_store %arg5[%c0_31, %c0_32, %c0_33], %49 {strides = array<i32>} : memref<1x8x128xf32, #tpu.memory_space<vmem>>, vector<1x8x128xf32>,
    } else {
    }
    return
  }
  func.func @transform_0(%arg0: i32, %arg1: i32) -> (i32, i32) {
    %c1_i32 = arith.constant 1 : i32
    %0 = arith.muli %arg0, %c1_i32 : i32
    %1 = arith.addi %0, %arg1 : i32
    %c0_i32 = arith.constant 0 : i32
    %c0_i32_0 = arith.constant 0 : i32
    return %1, %c0_i32 : i32, i32
  }
  func.func @transform_1(%arg0: i32, %arg1: i32) -> (i32, i32) {
    %c1_i32 = arith.constant 1 : i32
    %0 = arith.muli %arg0, %c1_i32 : i32
    %1 = arith.addi %0, %arg1 : i32
    %c0_i32 = arith.constant 0 : i32
    %c0_i32_0 = arith.constant 0 : i32
    return %1, %c0_i32 : i32, i32
  }
  func.func @transform_2(%arg0: i32, %arg1: i32) -> (i32, i32, i32) {
    %c0_i32 = arith.constant 0 : i32
    %c0_i32_0 = arith.constant 0 : i32
    %c0_i32_1 = arith.constant 0 : i32
    return %arg0, %c0_i32, %c0_i32_0 : i32, i32, i32
  }
  func.func @transform_3(%arg0: i32, %arg1: i32) -> (i32, i32, i32) {
    %c0_i32 = arith.constant 0 : i32
    %c0_i32_0 = arith.constant 0 : i32
    %c0_i32_1 = arith.constant 0 : i32
    return %arg0, %c0_i32, %c0_i32_0 : i32, i32, i32
  }
}

</mosaic_0001>

<llo_original>
// kernel: tpu_custom_call.1
$region0: #{tpu_custom_call.1}
  #allocation0 [shape = 'u32[]', space=smem, size = 0x4, offset = 0x4, fixed_abs, tag = 'smem constant byte address 0x4 - core index']
  #allocation1 [shape = 'u32[144,128]{1,0:T(1,128)}', space=vmem, size = 0x12000, scoped, tag = 'internal scratch']
  #allocation2 [shape = 'f32[8,128]{1,0:T(8,128)}', space=vmem, size = 0x1000, scoped, tag = 'scratch operand']
  #allocation3 [shape = 'f32[8,128]{1,0:T(8,128)}', space=vmem, size = 0x1000, scoped, tag = 'scratch operand']
  %s0 = inlined_call_operand.hbm [shape: f32[16,128], index: 0, kind: input, shape index: {}]
  %s1 = inlined_call_operand.hbm [shape: f32[16,128], index: 1, kind: input, shape index: {}]
  %s2 = inlined_call_operand.hbm [shape: f32[1,8,128], index: 2, kind: output, shape index: {0}]
  %s3 = inlined_call_operand.hbm [shape: f32[1,8,128], index: 3, kind: output, shape index: {1}]
  %4 = xla_tuple %s2, %s3
  %s5 = sld [smem:[#allocation0]]
  $region42: #{tpu_custom_call.1} parent=0
    _
  %s7 = ssub.s32 1, %s5
  %s8 = scalar_select 0, %s7, %s5
  $region1: #{tpu_custom_call.1} parent=0
    #allocation4 [shape = 'u8[8192]{0}', space=vmem, size = 0x2000, scoped, tag = 'input window, operand 0, single buffered']
    #allocation5 [shape = 's32[1]{0}', space=sflag, size = 0x4, scoped, tag = 'scoped memory for tpu_custom_call.1']
    #allocation6 [shape = 's32[1]{0}', space=sflag, size = 0x4, scoped, tag = 'scoped memory for tpu_custom_call.1']
    #allocation7 [shape = 'u8[8192]{0}', space=vmem, size = 0x2000, scoped, tag = 'input window, operand 1, single buffered']
    #allocation8 [shape = 's32[1]{0}', space=sflag, size = 0x4, scoped, tag = 'scoped memory for tpu_custom_call.1']
    #allocation9 [shape = 'u8[4096]{0}', space=vmem, size = 0x1000, scoped, tag = 'output window, operand 0, single buffered']
    #allocation10 [shape = 'u8[4096]{0}', space=vmem, size = 0x1000, scoped, tag = 'output window, operand 1, single buffered']
    #allocation11 [shape = 's32[1]{0}', space=sflag, size = 0x4, scoped, tag = 'scoped memory for tpu_custom_call.1']
    %9 = vsyncpa [#allocation5], 0
    %10 = vsyncpa [#allocation8], 0
    %11 = vsyncpa [#allocation6], 0
    %12 = vsyncpa [#allocation11], 0
    // Predicated region
    $region2: #{tpu_custom_call.1} parent=1 // pred_check
      _
    $region3: #{tpu_custom_call.1} parent=1 // pred_check_branch
      %14 = sbr.rel (0) target = $region5
    $region4: #{tpu_custom_call.1} parent=1 // pred_region
      %s15 = sadd.s32 0, 0
      %s16 = smul.u32 2, %s15
      %s18 = ssub.s32 256, 256
      %19 = vsyncadd [#allocation5], %s18
      %s20 = smul.addr %s16, 128
      %s21 = scalar_lea.hbm %s0, %s20
      %s22 = sshll.u32 [#allocation4], 4
      %s23 = int_to_ptr.vmem [resolvable:$true] %s22
      %28 = dma.hbm_to_vmem [thread:$0]  %s21, 256, %s23, [#allocation5], 128, 128, 8
    $region5: #{tpu_custom_call.1} parent=1 // pred_fallthru
      _
    // Predicated region
    $region6: #{tpu_custom_call.1} parent=1 // pred_check
      _
    $region7: #{tpu_custom_call.1} parent=1 // pred_check_branch
      %30 = sbr.rel (0) target = $region9
    $region8: #{tpu_custom_call.1} parent=1 // pred_region
      %s31 = sadd.s32 0, 0
      %s32 = smul.u32 2, %s31
      %s34 = ssub.s32 256, 256
      %35 = vsyncadd [#allocation8], %s34
      %s36 = smul.addr %s32, 128
      %s37 = scalar_lea.hbm %s1, %s36
      %s38 = sshll.u32 [#allocation7], 4
      %s39 = int_to_ptr.vmem [resolvable:$true] %s38
      %44 = dma.hbm_to_vmem [thread:$0]  %s37, 256, %s39, [#allocation8], 128, 128, 8
    $region9: #{tpu_custom_call.1} parent=1 // pred_fallthru
      _
    // Predicated region
    $region10: #{tpu_custom_call.1} parent=1 // pred_check
      _
    $region11: #{tpu_custom_call.1} parent=1 // pred_check_branch
      %46 = sbr.rel (0) target = $region13
    $region12: #{tpu_custom_call.1} parent=1 // pred_region
      %47 = dma.done [#allocation5], 256
    $region13: #{tpu_custom_call.1} parent=1 // pred_fallthru
      _
    // Predicated region
    $region14: #{tpu_custom_call.1} parent=1 // pred_check
      _
    $region15: #{tpu_custom_call.1} parent=1 // pred_check_branch
      %49 = sbr.rel (0) target = $region17
    $region16: #{tpu_custom_call.1} parent=1 // pred_region
      %50 = dma.done [#allocation8], 256
    $region17: #{tpu_custom_call.1} parent=1 // pred_fallthru
      _
    %s51 = sadd.s32 0, 0
    %s52 = smul.u32 2, %s51
    %s53 = sadd.s32 0, 0
    %s54 = smul.u32 2, %s53
    %p55 = scmp.eq.s32.totalorder 0, 0
    // Predicated region
    $region18: #{tpu_custom_call.1} parent=1 // pred_check
      %p56 = pneg %p55
    $region19: #{tpu_custom_call.1} parent=1 // pred_check_branch
      %58 = sbr.rel (%p56) target = $region21
    $region20: #{tpu_custom_call.1} parent=1 // pred_region
      %59 = vst [vmem:[#allocation2] sm:$0xff] 0.0
      %60 = vst [vmem:[#allocation3] sm:$0xff] 0.0
    $region21: #{tpu_custom_call.1} parent=1 // pred_fallthru
      _
    %v61 = vld [vmem:[#allocation7] sm:$0xff]
    %v62 = vld [vmem:[#allocation7 + $0x8] sm:$0xff]
    %v63 = vld [vmem:[#allocation4] sm:$0xff]
    %v64 = vld [vmem:[#allocation4 + $0x8] sm:$0xff]
    %vm65 = vcmp.gt.f32.partialorder %v61, 0.0
    %vm66 = vcmp.gt.f32.partialorder %v62, 0.0
    %v67 = vsel %vm65, 1, 0
    %v68 = vsel %vm66, 1, 0
    %v69 = vcvt.s32.f32 %v67
    %v70 = vcvt.s32.f32 %v68
    %v71 = vsub.f32 %v61, %v63
    %v72 = vsub.f32 %v62, %v64
    %v73 = vsel %vm65, %v71, 0.0
    %v74 = vsel %vm66, %v72, 0.0
    %v75 = vmul.f32 %v73, %v73
    %v76 = vmul.f32 %v74, %v74
    %v77 = vmul.f32 %v75, 0.25
    %v78 = vmul.f32 %v76, 0.25
    %v79 = vadd.f32 %v77, 1.0
    %v80 = vadd.f32 %v78, 1.0
    %v81 = vrsqrt.pop %v79
    %v82 = vmul.f32 %v79, %v81
    %vm83 = vcmp.eq.f32.partialorder %v79, inf
    %v84 = vsel %vm83, %v79, %v82
    %vm85 = vcmp.eq.f32.partialorder %v79, 0.0
    %v86 = vand.u32 %v79, 2147483648
    %v87 = vsel %vm85, %v86, %v84
    %v88 = vrsqrt.pop %v80
    %v89 = vmul.f32 %v80, %v88
    %vm90 = vcmp.eq.f32.partialorder %v80, inf
    %v91 = vsel %vm90, %v80, %v89
    %vm92 = vcmp.eq.f32.partialorder %v80, 0.0
    %v93 = vand.u32 %v80, 2147483648
    %v94 = vsel %vm92, %v93, %v91
    %v95 = vsub.f32 %v87, 1.0
    %v96 = vsub.f32 %v94, 1.0
    %v97 = vld [vmem:[#allocation2] sm:$0xff]
    %v98 = vadd.f32 %v95, %v96
    %v99 = vadd.f32 %v97, %v98
    %100 = vst [vmem:[#allocation2] sm:$0xff] %v99
    %v101 = vld [vmem:[#allocation3] sm:$0xff]
    %v102 = vadd.f32 %v69, %v70
    %v103 = vadd.f32 %v101, %v102
    %104 = vst [vmem:[#allocation3] sm:$0xff] %v103
    // Predicated region
    $region22: #{tpu_custom_call.1} parent=1 // pred_check
      %p105 = pneg %p55
    $region23: #{tpu_custom_call.1} parent=1 // pred_check_branch
      %107 = sbr.rel (%p105) target = $region25
    $region24: #{tpu_custom_call.1} parent=1 // pred_region
      %v108 = vld [vmem:[#allocation2] sm:$0xff]
      %109 = vadd.xlane.f32.xlu0 %v108
      %v110 = vpop.xlane.xlu0 %109
      %v111 = vrot.slane %v110, 4
      %v112 = vadd.f32 %v110, %v111
      %v113 = vrot.slane %v112, 2
      %v114 = vadd.f32 %v112, %v113
      %v115 = vrot.slane %v114, 1
      %v116 = vadd.f32 %v114, %v115
      %s117 = vtos %v116
      %v118 = vld [vmem:[#allocation3] sm:$0xff]
      %119 = vadd.xlane.f32.xlu0 %v118
      %v120 = vpop.xlane.xlu0 %119
      %v121 = vrot.slane %v120, 4
      %v122 = vadd.f32 %v120, %v121
      %v123 = vrot.slane %v122, 2
      %v124 = vadd.f32 %v122, %v123
      %v125 = vrot.slane %v124, 1
      %v126 = vadd.f32 %v124, %v125
      %s127 = vtos %v126
      %v128 = vstv %s117
      %v129 = vadd.f32 %v128, 0.0
      %130 = vst [vmem:[#allocation9] sm:$0xff] %v129
      %v131 = vstv %s127
      %v132 = vadd.f32 %v131, 0.0
      %133 = vst [vmem:[#allocation10] sm:$0xff] %v132
    $region25: #{tpu_custom_call.1} parent=1 // pred_fallthru
      _
    // Predicated region
    $region26: #{tpu_custom_call.1} parent=1 // pred_check
      _
    $region27: #{tpu_custom_call.1} parent=1 // pred_check_branch
      %135 = sbr.rel (0) target = $region29
    $region28: #{tpu_custom_call.1} parent=1 // pred_region
      %s137 = ssub.s32 128, 128
      %138 = vsyncadd [#allocation6], %s137
      %s140 = sshll.u32 [#allocation9], 4
      %s141 = int_to_ptr.vmem [resolvable:$true] %s140
      %143 = dma.vmem_to_hbm [thread:$0]  %s141, 128, %s2, [#allocation6]
    $region29: #{tpu_custom_call.1} parent=1 // pred_fallthru
      _
    // Predicated region
    $region30: #{tpu_custom_call.1} parent=1 // pred_check
      _
    $region31: #{tpu_custom_call.1} parent=1 // pred_check_branch
      %145 = sbr.rel (0) target = $region33
    $region32: #{tpu_custom_call.1} parent=1 // pred_region
      %s147 = ssub.s32 128, 128
      %148 = vsyncadd [#allocation11], %s147
      %s150 = sshll.u32 [#allocation10], 4
      %s151 = int_to_ptr.vmem [resolvable:$true] %s150
      %153 = dma.vmem_to_hbm [thread:$0]  %s151, 128, %s3, [#allocation11]
    $region33: #{tpu_custom_call.1} parent=1 // pred_fallthru
      _
    // Predicated region
    $region34: #{tpu_custom_call.1} parent=1 // pred_check
      _
    $region35: #{tpu_custom_call.1} parent=1 // pred_check_branch
      %155 = sbr.rel (0) target = $region37
    $region36: #{tpu_custom_call.1} parent=1 // pred_region
      %156 = dma.done [#allocation6], 128
    $region37: #{tpu_custom_call.1} parent=1 // pred_fallthru
      _
    // Predicated region
    $region38: #{tpu_custom_call.1} parent=1 // pred_check
      _
    $region39: #{tpu_custom_call.1} parent=1 // pred_check_branch
      %158 = sbr.rel (0) target = $region41
    $region40: #{tpu_custom_call.1} parent=1 // pred_region
      %159 = dma.done [#allocation11], 128
    $region41: #{tpu_custom_call.1} parent=1 // pred_fallthru
      _
    %160 = vsyncpa [#allocation5], 1
    %161 = vsyncpa [#allocation8], 1
    %162 = vsyncpa [#allocation6], 1
    %163 = vsyncpa [#allocation11], 1

</llo_original>
